<compile_context>
chip_gen: v6e
topology: v6e:2x2x1
jax: 0.10.0
libtpu: 0.0.40
codegen_flags: <defaults>
</compile_context>

<pallas_src>
import functools

import jax
import jax.numpy as jnp
from jax.experimental import pallas as pl
from jax.experimental.pallas import tpu as pltpu


def _mix32(x):
    """lowbias32 finalizer — good avalanche, pure VPU uint32 ops."""
    x = x ^ (x >> 16)
    x = x * jnp.uint32(0x7FEB352D)
    x = x ^ (x >> 15)
    x = x * jnp.uint32(0x846CA68B)
    x = x ^ (x >> 16)
    return x


def _relu_drop_kernel(seed_ref, x_ref, o_ref, *, p, apply_dropout):
    """One row-tile of fused ReLU + (optional) inverted dropout."""
    x = x_ref[...]                       # (TN, H), native dtype
    y = jnp.maximum(x, 0)                # ReLU (VPU)

    if apply_dropout:
        tn, feat = x_ref.shape
        # Global element index -> stateless hash -> uniform uint32.
        row = jax.lax.broadcasted_iota(jnp.int32, (tn, feat), 0)
        col = jax.lax.broadcasted_iota(jnp.int32, (tn, feat), 1)
        g_row = pl.program_id(0) * tn + row
        idx = (g_row * feat + col).astype(jnp.uint32)
        seed = seed_ref[0].astype(jnp.uint32)
        h = idx * jnp.uint32(0x9E3779B1) + seed * jnp.uint32(0x85EBCA77)
        h = _mix32(h)
        h = _mix32(h ^ jnp.uint32(0xC2B2AE3D))
        # drop iff h < p * 2^32  (drop probability == p)
        thresh = jnp.uint32(min(int(p * 4294967296.0), 0xFFFFFFFF))
        keep = h >= thresh
        scale = jnp.asarray(0.0 if p >= 1.0 else 1.0 / (1.0 - p), dtype=x.dtype)
        y = jnp.where(keep, y * scale, 0)

    o_ref[...] = y.astype(o_ref.dtype)


def _choose_tile_rows(n_rows, n_feat, itemsize, target_bytes=2 << 20):
    """Biggest row tile (multiple of 8) with block size ~target_bytes."""
    rows = target_bytes // max(1, n_feat * itemsize)
    rows = max(8, (rows // 8) * 8)
    if rows >= n_rows:
        return n_rows            # single block == full array (always legal)
    return int(rows)


def fused_relu_drop(inp, *, p=0.5, training=False, seed=0, tile_n=None):
    """Pallas implementation of FusedReLUDrop.forward(input)."""
    if p < 0.0 or p > 1.0:
        raise ValueError(
            "dropout probability has to be between 0 and 1, but got {}".format(p))
    N, H = inp.shape     # H should be a multiple of 128 for lane-dense stores
    if tile_n is None:
        tile_n = _choose_tile_rows(N, H, inp.dtype.itemsize)

    apply_dropout = bool(training) and (p > 0.0)
    seed_arr = jnp.asarray([seed], dtype=jnp.int32)

    kernel = functools.partial(
        _relu_drop_kernel, p=float(p), apply_dropout=apply_dropout)

    grid_spec = pltpu.PrefetchScalarGridSpec(
        num_scalar_prefetch=1,                            # seed lands in SMEM
        grid=(pl.cdiv(N, tile_n),),
        in_specs=[pl.BlockSpec((tile_n, H), lambda i, seed: (i, 0))],
        out_specs=pl.BlockSpec((tile_n, H), lambda i, seed: (i, 0)),
    )

    return pl.pallas_call(
        kernel,
        out_shape=jax.ShapeDtypeStruct((N, H), inp.dtype),
        grid_spec=grid_spec,
        compiler_params=pltpu.CompilerParams(
            dimension_semantics=("parallel",),            # stateless RNG => parallel OK
            vmem_limit_bytes=32 * 1024 * 1024,            # safe on v5e/v6e/v7x
        ),
    )(seed_arr, inp)


if __name__ == "__main__":
    key = jax.random.PRNGKey(0)

    N, H = 256, 128          # small GAT-like activation: 256 nodes, 128 features
    p = 0.5                  # module default

    inp = jax.random.normal(key, (N, H), dtype=jnp.float32)

    # Training path: ReLU + dropout(p)
    out_train = jax.block_until_ready(
        fused_relu_drop(inp, p=p, training=True, seed=42))

    # Eval path: ReLU only
    out_eval = jax.block_until_ready(
        fused_relu_drop(inp, p=p, training=False))

    # --- sanity checks against a pure-JAX reference ---
    ref_relu = jnp.maximum(inp, 0.0)

    # Eval must match ReLU(inp) exactly.
    assert jnp.allclose(out_eval, ref_relu, atol=0.0), "eval path mismatch"

    # Training: every output is either 0 (dropped / ReLU-zeroed) or
    # relu(x) / (1 - p) for a kept element.
    scaled = ref_relu * (1.0 / (1.0 - p))
    is_zero = out_train == 0.0
    is_kept = jnp.isclose(out_train, scaled, rtol=1e-5, atol=1e-6)
    assert bool(jnp.all(is_zero | is_kept)), "training path mismatch"

    # Empirical drop rate on strictly-positive entries should be near p.
    pos = ref_relu > 0
    drop_rate = jnp.sum(jnp.where(pos, is_zero, False)) / jnp.maximum(jnp.sum(pos), 1)
    assert abs(float(drop_rate) - p) < 0.05, f"drop rate {float(drop_rate)} far from {p}"

    print("KERNEL_OK")
</pallas_src>

<mosaic_0001>
module attributes {stable_mosaic.version = 11 : i64} {
  func.func @_relu_drop_kernel(%arg0: i32, %arg1: memref<1xi32, #tpu.memory_space<smem>>, %arg2: memref<256x128xf32, #tpu.memory_space<vmem>>, %arg3: memref<256x128xf32, #tpu.memory_space<vmem>>) attributes {dimension_semantics = [#tpu.dimension_semantics<parallel>], iteration_bounds = array<i64: 1>, scalar_prefetch = 1 : i64, scratch_operands = 0 : i64, tpu.core_type = #tpu.core_type<tc>, window_params = [{transform_indices = @transform_0, window_bounds = array<i64: 256, 128>}, {transform_indices = @transform_1, window_bounds = array<i64: 256, 128>}]} {
    %c0 = arith.constant 0 : index
    %c0_0 = arith.constant 0 : index
    %0 = vector.load %arg2[%c0, %c0_0] : memref<256x128xf32, #tpu.memory_space<vmem>>, vector<256x128xf32>
    %cst = arith.constant 0.000000e+00 : f32
    %1 = vector.broadcast %cst : f32 to vector<256x128xf32>
    %2 = arith.maximumf %0, %1 : vector<256x128xf32>
    %3 = tpu.iota {dimensions = array<i32: 0>} : vector<256x128xi32>
    %4 = tpu.iota {dimensions = array<i32: 1>} : vector<256x128xi32>
    %c256_i32 = arith.constant 256 : i32
    %5 = arith.muli %arg0, %c256_i32 : i32
    %6 = vector.broadcast %5 : i32 to vector<256x128xi32>
    %7 = arith.addi %6, %3 : vector<256x128xi32>
    %c128_i32 = arith.constant 128 : i32
    %8 = vector.broadcast %c128_i32 : i32 to vector<256x128xi32>
    %9 = arith.muli %7, %8 : vector<256x128xi32>
    %10 = arith.addi %9, %4 : vector<256x128xi32>
    %c0_1 = arith.constant 0 : index
    %11 = memref.load %arg1[%c0_1] : memref<1xi32, #tpu.memory_space<smem>>
    %c-1640531535_i32 = arith.constant -1640531535 : i32
    %12 = vector.broadcast %c-1640531535_i32 : i32 to vector<256x128xi32>
    %13 = arith.muli %10, %12 : vector<256x128xi32>
    %c-2048144777_i32 = arith.constant -2048144777 : i32
    %14 = arith.muli %11, %c-2048144777_i32 : i32
    %15 = vector.broadcast %14 : i32 to vector<256x128xi32>
    %16 = arith.addi %13, %15 : vector<256x128xi32>
    %c16_i32 = arith.constant 16 : i32
    %17 = vector.broadcast %c16_i32 : i32 to vector<256x128xi32>
    %18 = arith.shrui %16, %17 : vector<256x128xi32>
    %19 = arith.xori %16, %18 : vector<256x128xi32>
    %c2146121005_i32 = arith.constant 2146121005 : i32
    %20 = vector.broadcast %c2146121005_i32 : i32 to vector<256x128xi32>
    %21 = arith.muli %19, %20 : vector<256x128xi32>
    %c15_i32 = arith.constant 15 : i32
    %22 = vector.broadcast %c15_i32 : i32 to vector<256x128xi32>
    %23 = arith.shrui %21, %22 : vector<256x128xi32>
    %24 = arith.xori %21, %23 : vector<256x128xi32>
    %c-2073254261_i32 = arith.constant -2073254261 : i32
    %25 = vector.broadcast %c-2073254261_i32 : i32 to vector<256x128xi32>
    %26 = arith.muli %24, %25 : vector<256x128xi32>
    %c16_i32_2 = arith.constant 16 : i32
    %27 = vector.broadcast %c16_i32_2 : i32 to vector<256x128xi32>
    %28 = arith.shrui %26, %27 : vector<256x128xi32>
    %29 = arith.xori %26, %28 : vector<256x128xi32>
    %c-1028477379_i32 = arith.constant -1028477379 : i32
    %30 = vector.broadcast %c-1028477379_i32 : i32 to vector<256x128xi32>
    %31 = arith.xori %29, %30 : vector<256x128xi32>
    %c16_i32_3 = arith.constant 16 : i32
    %32 = vector.broadcast %c16_i32_3 : i32 to vector<256x128xi32>
    %33 = arith.shrui %31, %32 : vector<256x128xi32>
    %34 = arith.xori %31, %33 : vector<256x128xi32>
    %c2146121005_i32_4 = arith.constant 2146121005 : i32
    %35 = vector.broadcast %c2146121005_i32_4 : i32 to vector<256x128xi32>
    %36 = arith.muli %34, %35 : vector<256x128xi32>
    %c15_i32_5 = arith.constant 15 : i32
    %37 = vector.broadcast %c15_i32_5 : i32 to vector<256x128xi32>
    %38 = arith.shrui %36, %37 : vector<256x128xi32>
    %39 = arith.xori %36, %38 : vector<256x128xi32>
    %c-2073254261_i32_6 = arith.constant -2073254261 : i32
    %40 = vector.broadcast %c-2073254261_i32_6 : i32 to vector<256x128xi32>
    %41 = arith.muli %39, %40 : vector<256x128xi32>
    %c16_i32_7 = arith.constant 16 : i32
    %42 = vector.broadcast %c16_i32_7 : i32 to vector<256x128xi32>
    %43 = arith.shrui %41, %42 : vector<256x128xi32>
    %44 = arith.xori %41, %43 : vector<256x128xi32>
    %c-2147483648_i32 = arith.constant -2147483648 : i32
    %45 = vector.broadcast %c-2147483648_i32 : i32 to vector<256x128xi32>
    %46 = arith.cmpi uge, %44, %45 : vector<256x128xi32>
    %cst_8 = arith.constant 2.000000e+00 : f32
    %47 = vector.broadcast %cst_8 : f32 to vector<256x128xf32>
    %48 = arith.mulf %2, %47 : vector<256x128xf32>
    %c0_i32 = arith.constant 0 : i32
    %49 = arith.sitofp %c0_i32 : i32 to f32
    %50 = vector.broadcast %49 : f32 to vector<256x128xf32>
    %51 = arith.select %46, %48, %50 : vector<256x128xi1>, vector<256x128xf32>
    %c0_9 = arith.constant 0 : index
    %c0_10 = arith.constant 0 : index
    %52 = vector.load %arg3[%c0_9, %c0_10] : memref<256x128xf32, #tpu.memory_space<vmem>>, vector<256x128xf32>
    tpu.vector_store %arg3[%c0_9, %c0_10], %51 {strides = array<i32>} : memref<256x128xf32, #tpu.memory_space<vmem>>, vector<256x128xf32>,
    return
  }
  func.func @transform_0(%arg0: i32, %arg1: memref<1xi32, #tpu.memory_space<smem>>) -> (i32, i32) {
    %c0_i32 = arith.constant 0 : i32
    %c0_i32_0 = arith.constant 0 : i32
    return %arg0, %c0_i32 : i32, i32
  }
  func.func @transform_1(%arg0: i32, %arg1: memref<1xi32, #tpu.memory_space<smem>>) -> (i32, i32) {
    %c0_i32 = arith.constant 0 : i32
    %c0_i32_0 = arith.constant 0 : i32
    return %arg0, %c0_i32 : i32, i32
  }
}

</mosaic_0001>

<llo_original>
// kernel: tpu_custom_call.1
$region0: #{tpu_custom_call.1}
  #allocation0 [shape = 'u32[]', space=smem, size = 0x4, offset = 0x4, fixed_abs, tag = 'smem constant byte address 0x4 - core index']
  #allocation1 [shape = 'u32[144,128]{1,0:T(1,128)}', space=vmem, size = 0x12000, scoped, tag = 'internal scratch']
  #allocation2 [shape = 's32[1]{0}', space=sflag, size = 0x4, scoped, tag = 'scoped memory for tpu_custom_call.1']
  #allocation3 [shape = 's32[1]{0:T(128)S(6)}', space=smem, size = 0x200, scoped, tag = 'prefetched SMEM operand 0']
  %s0 = inlined_call_operand.<no memory space> [shape: s32[1], index: 0, kind: input, shape index: {}]
  %s1 = inlined_call_operand.hbm [shape: f32[256,128], index: 1, kind: input, shape index: {}]
  %s2 = inlined_call_operand.hbm [shape: f32[256,128], index: 2, kind: output, shape index: {}]
  %s3 = sld [smem:[#allocation0]]
  $region18: #{tpu_custom_call.1} parent=0
    _
  %s5 = ssub.s32 1, %s3
  %s6 = scalar_select 0, %s5, %s3
  %7 = sst [smem:[#allocation3]] %s0
  $region1: #{tpu_custom_call.1} parent=0
    #allocation4 [shape = 'u8[131072]{0}', space=vmem, size = 0x20000, scoped, tag = 'input window, operand 1, single buffered']
    #allocation5 [shape = 's32[1]{0}', space=sflag, size = 0x4, scoped, tag = 'scoped memory for tpu_custom_call.1']
    #allocation6 [shape = 's32[1]{0}', space=sflag, size = 0x4, scoped, tag = 'scoped memory for tpu_custom_call.1']
    #allocation7 [shape = 'u8[131072]{0}', space=vmem, size = 0x20000, scoped, tag = 'output window, operand 0, single buffered']
    %8 = vsyncpa [#allocation5], 0
    %9 = vsyncpa [#allocation6], 0
    // Predicated region
    $region2: #{tpu_custom_call.1} parent=1 // pred_check
      _
    $region3: #{tpu_custom_call.1} parent=1 // pred_check_branch
      %11 = sbr.rel (0) target = $region5
    $region4: #{tpu_custom_call.1} parent=1 // pred_region
      %s13 = ssub.s32 4096, 4096
      %14 = vsyncadd [#allocation5], %s13
      %s15 = sshll.u32 [#allocation4], 4
      %s16 = int_to_ptr.vmem [resolvable:$true] %s15
      %21 = dma.hbm_to_vmem [thread:$0]  %s1, 4096, %s16, [#allocation5], 128, 128, 8
    $region5: #{tpu_custom_call.1} parent=1 // pred_fallthru
      _
    // Predicated region
    $region6: #{tpu_custom_call.1} parent=1 // pred_check
      _
    $region7: #{tpu_custom_call.1} parent=1 // pred_check_branch
      %23 = sbr.rel (0) target = $region9
    $region8: #{tpu_custom_call.1} parent=1 // pred_region
      %24 = dma.done [#allocation5], 4096
    $region9: #{tpu_custom_call.1} parent=1 // pred_fallthru
      _
    %v25 = vld [vmem:[#allocation4] sm:$0xff]
    %v26 = vld [vmem:[#allocation4 + $0x8] sm:$0xff]
    %v27 = vld [vmem:[#allocation4 + $0x10] sm:$0xff]
    %v28 = vld [vmem:[#allocation4 + $0x18] sm:$0xff]
    %v29 = vld [vmem:[#allocation4 + $0x20] sm:$0xff]
    %v30 = vld [vmem:[#allocation4 + $0x28] sm:$0xff]
    %v31 = vld [vmem:[#allocation4 + $0x30] sm:$0xff]
    %v32 = vld [vmem:[#allocation4 + $0x38] sm:$0xff]
    %v33 = vld [vmem:[#allocation4 + $0x40] sm:$0xff]
    %v34 = vld [vmem:[#allocation4 + $0x48] sm:$0xff]
    %v35 = vld [vmem:[#allocation4 + $0x50] sm:$0xff]
    %v36 = vld [vmem:[#allocation4 + $0x58] sm:$0xff]
    %v37 = vld [vmem:[#allocation4 + $0x60] sm:$0xff]
    %v38 = vld [vmem:[#allocation4 + $0x68] sm:$0xff]
    %v39 = vld [vmem:[#allocation4 + $0x70] sm:$0xff]
    %v40 = vld [vmem:[#allocation4 + $0x78] sm:$0xff]
    %v41 = vld [vmem:[#allocation4 + $0x80] sm:$0xff]
    %v42 = vld [vmem:[#allocation4 + $0x88] sm:$0xff]
    %v43 = vld [vmem:[#allocation4 + $0x90] sm:$0xff]
    %v44 = vld [vmem:[#allocation4 + $0x98] sm:$0xff]
    %v45 = vld [vmem:[#allocation4 + $0xa0] sm:$0xff]
    %v46 = vld [vmem:[#allocation4 + $0xa8] sm:$0xff]
    %v47 = vld [vmem:[#allocation4 + $0xb0] sm:$0xff]
    %v48 = vld [vmem:[#allocation4 + $0xb8] sm:$0xff]
    %v49 = vld [vmem:[#allocation4 + $0xc0] sm:$0xff]
    %v50 = vld [vmem:[#allocation4 + $0xc8] sm:$0xff]
    %v51 = vld [vmem:[#allocation4 + $0xd0] sm:$0xff]
    %v52 = vld [vmem:[#allocation4 + $0xd8] sm:$0xff]
    %v53 = vld [vmem:[#allocation4 + $0xe0] sm:$0xff]
    %v54 = vld [vmem:[#allocation4 + $0xe8] sm:$0xff]
    %v55 = vld [vmem:[#allocation4 + $0xf0] sm:$0xff]
    %v56 = vld [vmem:[#allocation4 + $0xf8] sm:$0xff]
    %v57 = vmax.f32 %v25, 0.0
    %v58 = vmax.f32 %v26, 0.0
    %v59 = vmax.f32 %v27, 0.0
    %v60 = vmax.f32 %v28, 0.0
    %v61 = vmax.f32 %v29, 0.0
    %v62 = vmax.f32 %v30, 0.0
    %v63 = vmax.f32 %v31, 0.0
    %v64 = vmax.f32 %v32, 0.0
    %v65 = vmax.f32 %v33, 0.0
    %v66 = vmax.f32 %v34, 0.0
    %v67 = vmax.f32 %v35, 0.0
    %v68 = vmax.f32 %v36, 0.0
    %v69 = vmax.f32 %v37, 0.0
    %v70 = vmax.f32 %v38, 0.0
    %v71 = vmax.f32 %v39, 0.0
    %v72 = vmax.f32 %v40, 0.0
    %v73 = vmax.f32 %v41, 0.0
    %v74 = vmax.f32 %v42, 0.0
    %v75 = vmax.f32 %v43, 0.0
    %v76 = vmax.f32 %v44, 0.0
    %v77 = vmax.f32 %v45, 0.0
    %v78 = vmax.f32 %v46, 0.0
    %v79 = vmax.f32 %v47, 0.0
    %v80 = vmax.f32 %v48, 0.0
    %v81 = vmax.f32 %v49, 0.0
    %v82 = vmax.f32 %v50, 0.0
    %v83 = vmax.f32 %v51, 0.0
    %v84 = vmax.f32 %v52, 0.0
    %v85 = vmax.f32 %v53, 0.0
    %v86 = vmax.f32 %v54, 0.0
    %v87 = vmax.f32 %v55, 0.0
    %v88 = vmax.f32 %v56, 0.0
    %v89 = vlaneseq
    %v90 = vshrl.u32 %v89, 7
    %v91 = vadd.s32 %v90, 8
    %v92 = vadd.s32 %v90, 16
    %v93 = vadd.s32 %v90, 24
    %v94 = vadd.s32 %v90, 32
    %v95 = vadd.s32 %v90, 40
    %v96 = vadd.s32 %v90, 48
    %v97 = vadd.s32 %v90, 56
    %v98 = vadd.s32 %v90, 64
    %v99 = vadd.s32 %v90, 72
    %v100 = vadd.s32 %v90, 80
    %v101 = vadd.s32 %v90, 88
    %v102 = vadd.s32 %v90, 96
    %v103 = vadd.s32 %v90, 104
    %v104 = vadd.s32 %v90, 112
    %v105 = vadd.s32 %v90, 120
    %v106 = vadd.s32 %v90, 128
    %v107 = vadd.s32 %v90, 136
    %v108 = vadd.s32 %v90, 144
    %v109 = vadd.s32 %v90, 152
    %v110 = vadd.s32 %v90, 160
    %v111 = vadd.s32 %v90, 168
    %v112 = vadd.s32 %v90, 176
    %v113 = vadd.s32 %v90, 184
    %v114 = vadd.s32 %v90, 192
    %v115 = vadd.s32 %v90, 200
    %v116 = vadd.s32 %v90, 208
    %v117 = vadd.s32 %v90, 216
    %v118 = vadd.s32 %v90, 224
    %v119 = vadd.s32 %v90, 232
    %v120 = vadd.s32 %v90, 240
    %v121 = vadd.s32 %v90, 248
    %v122 = vlaneseq
    %v123 = vand.u32 %v122, 127
    %s124 = smul.u32 0, 256
    %v125 = vstv %s124
    %v126 = vadd.s32 %v125, %v90
    %v127 = vadd.s32 %v125, %v91
    %v128 = vadd.s32 %v125, %v92
    %v129 = vadd.s32 %v125, %v93
    %v130 = vadd.s32 %v125, %v94
    %v131 = vadd.s32 %v125, %v95
    %v132 = vadd.s32 %v125, %v96
    %v133 = vadd.s32 %v125, %v97
    %v134 = vadd.s32 %v125, %v98
    %v135 = vadd.s32 %v125, %v99
    %v136 = vadd.s32 %v125, %v100
    %v137 = vadd.s32 %v125, %v101
    %v138 = vadd.s32 %v125, %v102
    %v139 = vadd.s32 %v125, %v103
    %v140 = vadd.s32 %v125, %v104
    %v141 = vadd.s32 %v125, %v105
    %v142 = vadd.s32 %v125, %v106
    %v143 = vadd.s32 %v125, %v107
    %v144 = vadd.s32 %v125, %v108
    %v145 = vadd.s32 %v125, %v109
    %v146 = vadd.s32 %v125, %v110
    %v147 = vadd.s32 %v125, %v111
    %v148 = vadd.s32 %v125, %v112
    %v149 = vadd.s32 %v125, %v113
    %v150 = vadd.s32 %v125, %v114
    %v151 = vadd.s32 %v125, %v115
    %v152 = vadd.s32 %v125, %v116
    %v153 = vadd.s32 %v125, %v117
    %v154 = vadd.s32 %v125, %v118
    %v155 = vadd.s32 %v125, %v119
    %v156 = vadd.s32 %v125, %v120
    %v157 = vadd.s32 %v125, %v121
    %v158 = vmul.u32 %v126, 128
    %v159 = vmul.u32 %v127, 128
    %v160 = vmul.u32 %v128, 128
    %v161 = vmul.u32 %v129, 128
    %v162 = vmul.u32 %v130, 128
    %v163 = vmul.u32 %v131, 128
    %v164 = vmul.u32 %v132, 128
    %v165 = vmul.u32 %v133, 128
    %v166 = vmul.u32 %v134, 128
    %v167 = vmul.u32 %v135, 128
    %v168 = vmul.u32 %v136, 128
    %v169 = vmul.u32 %v137, 128
    %v170 = vmul.u32 %v138, 128
    %v171 = vmul.u32 %v139, 128
    %v172 = vmul.u32 %v140, 128
    %v173 = vmul.u32 %v141, 128
    %v174 = vmul.u32 %v142, 128
    %v175 = vmul.u32 %v143, 128
    %v176 = vmul.u32 %v144, 128
    %v177 = vmul.u32 %v145, 128
    %v178 = vmul.u32 %v146, 128
    %v179 = vmul.u32 %v147, 128
    %v180 = vmul.u32 %v148, 128
    %v181 = vmul.u32 %v149, 128
    %v182 = vmul.u32 %v150, 128
    %v183 = vmul.u32 %v151, 128
    %v184 = vmul.u32 %v152, 128
    %v185 = vmul.u32 %v153, 128
    %v186 = vmul.u32 %v154, 128
    %v187 = vmul.u32 %v155, 128
    %v188 = vmul.u32 %v156, 128
    %v189 = vmul.u32 %v157, 128
    %v190 = vadd.s32 %v158, %v123
    %v191 = vadd.s32 %v159, %v123
    %v192 = vadd.s32 %v160, %v123
    %v193 = vadd.s32 %v161, %v123
    %v194 = vadd.s32 %v162, %v123
    %v195 = vadd.s32 %v163, %v123
    %v196 = vadd.s32 %v164, %v123
    %v197 = vadd.s32 %v165, %v123
    %v198 = vadd.s32 %v166, %v123
    %v199 = vadd.s32 %v167, %v123
    %v200 = vadd.s32 %v168, %v123
    %v201 = vadd.s32 %v169, %v123
    %v202 = vadd.s32 %v170, %v123
    %v203 = vadd.s32 %v171, %v123
    %v204 = vadd.s32 %v172, %v123
    %v205 = vadd.s32 %v173, %v123
    %v206 = vadd.s32 %v174, %v123
    %v207 = vadd.s32 %v175, %v123
    %v208 = vadd.s32 %v176, %v123
    %v209 = vadd.s32 %v177, %v123
    %v210 = vadd.s32 %v178, %v123
    %v211 = vadd.s32 %v179, %v123
    %v212 = vadd.s32 %v180, %v123
    %v213 = vadd.s32 %v181, %v123
    %v214 = vadd.s32 %v182, %v123
    %v215 = vadd.s32 %v183, %v123
    %v216 = vadd.s32 %v184, %v123
    %v217 = vadd.s32 %v185, %v123
    %v218 = vadd.s32 %v186, %v123
    %v219 = vadd.s32 %v187, %v123
    %v220 = vadd.s32 %v188, %v123
    %v221 = vadd.s32 %v189, %v123
    %s222 = sld [smem:[#allocation3]]
    %v223 = vmul.u32 %v190, 2654435761
    %v224 = vmul.u32 %v191, 2654435761
    %v225 = vmul.u32 %v192, 2654435761
    %v226 = vmul.u32 %v193, 2654435761
    %v227 = vmul.u32 %v194, 2654435761
    %v228 = vmul.u32 %v195, 2654435761
    %v229 = vmul.u32 %v196, 2654435761
    %v230 = vmul.u32 %v197, 2654435761
    %v231 = vmul.u32 %v198, 2654435761
    %v232 = vmul.u32 %v199, 2654435761
    %v233 = vmul.u32 %v200, 2654435761
    %v234 = vmul.u32 %v201, 2654435761
    %v235 = vmul.u32 %v202, 2654435761
    %v236 = vmul.u32 %v203, 2654435761
    %v237 = vmul.u32 %v204, 2654435761
    %v238 = vmul.u32 %v205, 2654435761
    %v239 = vmul.u32 %v206, 2654435761
    %v240 = vmul.u32 %v207, 2654435761
    %v241 = vmul.u32 %v208, 2654435761
    %v242 = vmul.u32 %v209, 2654435761
    %v243 = vmul.u32 %v210, 2654435761
    %v244 = vmul.u32 %v211, 2654435761
    %v245 = vmul.u32 %v212, 2654435761
    %v246 = vmul.u32 %v213, 2654435761
    %v247 = vmul.u32 %v214, 2654435761
    %v248 = vmul.u32 %v215, 2654435761
    %v249 = vmul.u32 %v216, 2654435761
    %v250 = vmul.u32 %v217, 2654435761
    %v251 = vmul.u32 %v218, 2654435761
    %v252 = vmul.u32 %v219, 2654435761
    %v253 = vmul.u32 %v220, 2654435761
    %v254 = vmul.u32 %v221, 2654435761
    %s255 = smul.u32 %s222, 2246822519
    %v256 = vstv %s255
    %v257 = vadd.s32 %v223, %v256
    %v258 = vadd.s32 %v224, %v256
    %v259 = vadd.s32 %v225, %v256
    %v260 = vadd.s32 %v226, %v256
    %v261 = vadd.s32 %v227, %v256
    %v262 = vadd.s32 %v228, %v256
    %v263 = vadd.s32 %v229, %v256
    %v264 = vadd.s32 %v230, %v256
    %v265 = vadd.s32 %v231, %v256
    %v266 = vadd.s32 %v232, %v256
    %v267 = vadd.s32 %v233, %v256
    %v268 = vadd.s32 %v234, %v256
    %v269 = vadd.s32 %v235, %v256
    %v270 = vadd.s32 %v236, %v256
    %v271 = vadd.s32 %v237, %v256
    %v272 = vadd.s32 %v238, %v256
    %v273 = vadd.s32 %v239, %v256
    %v274 = vadd.s32 %v240, %v256
    %v275 = vadd.s32 %v241, %v256
    %v276 = vadd.s32 %v242, %v256
    %v277 = vadd.s32 %v243, %v256
    %v278 = vadd.s32 %v244, %v256
    %v279 = vadd.s32 %v245, %v256
    %v280 = vadd.s32 %v246, %v256
    %v281 = vadd.s32 %v247, %v256
    %v282 = vadd.s32 %v248, %v256
    %v283 = vadd.s32 %v249, %v256
    %v284 = vadd.s32 %v250, %v256
    %v285 = vadd.s32 %v251, %v256
    %v286 = vadd.s32 %v252, %v256
    %v287 = vadd.s32 %v253, %v256
    %v288 = vadd.s32 %v254, %v256
    %v289 = vshrl.u32 %v257, 16
    %v290 = vshrl.u32 %v258, 16
    %v291 = vshrl.u32 %v259, 16
    %v292 = vshrl.u32 %v260, 16
    %v293 = vshrl.u32 %v261, 16
    %v294 = vshrl.u32 %v262, 16
    %v295 = vshrl.u32 %v263, 16
    %v296 = vshrl.u32 %v264, 16
    %v297 = vshrl.u32 %v265, 16
    %v298 = vshrl.u32 %v266, 16
    %v299 = vshrl.u32 %v267, 16
    %v300 = vshrl.u32 %v268, 16
    %v301 = vshrl.u32 %v269, 16
    %v302 = vshrl.u32 %v270, 16
    %v303 = vshrl.u32 %v271, 16
    %v304 = vshrl.u32 %v272, 16
    %v305 = vshrl.u32 %v273, 16
    %v306 = vshrl.u32 %v274, 16
    %v307 = vshrl.u32 %v275, 16
    %v308 = vshrl.u32 %v276, 16
    %v309 = vshrl.u32 %v277, 16
    %v310 = vshrl.u32 %v278, 16
    %v311 = vshrl.u32 %v279, 16
    %v312 = vshrl.u32 %v280, 16
    %v313 = vshrl.u32 %v281, 16
    %v314 = vshrl.u32 %v282, 16
    %v315 = vshrl.u32 %v283, 16
    %v316 = vshrl.u32 %v284, 16
    %v317 = vshrl.u32 %v285, 16
    %v318 = vshrl.u32 %v286, 16
    %v319 = vshrl.u32 %v287, 16
    %v320 = vshrl.u32 %v288, 16
    %v321 = vxor.u32 %v257, %v289
    %v322 = vxor.u32 %v258, %v290
    %v323 = vxor.u32 %v259, %v291
    %v324 = vxor.u32 %v260, %v292
    %v325 = vxor.u32 %v261, %v293
    %v326 = vxor.u32 %v262, %v294
    %v327 = vxor.u32 %v263, %v295
    %v328 = vxor.u32 %v264, %v296
    %v329 = vxor.u32 %v265, %v297
    %v330 = vxor.u32 %v266, %v298
    %v331 = vxor.u32 %v267, %v299
    %v332 = vxor.u32 %v268, %v300
    %v333 = vxor.u32 %v269, %v301
    %v334 = vxor.u32 %v270, %v302
    %v335 = vxor.u32 %v271, %v303
    %v336 = vxor.u32 %v272, %v304
    %v337 = vxor.u32 %v273, %v305
    %v338 = vxor.u32 %v274, %v306
    %v339 = vxor.u32 %v275, %v307
    %v340 = vxor.u32 %v276, %v308
    %v341 = vxor.u32 %v277, %v309
    %v342 = vxor.u32 %v278, %v310
    %v343 = vxor.u32 %v279, %v311
    %v344 = vxor.u32 %v280, %v312
    %v345 = vxor.u32 %v281, %v313
    %v346 = vxor.u32 %v282, %v314
    %v347 = vxor.u32 %v283, %v315
    %v348 = vxor.u32 %v284, %v316
    %v349 = vxor.u32 %v285, %v317
    %v350 = vxor.u32 %v286, %v318
    %v351 = vxor.u32 %v287, %v319
    %v352 = vxor.u32 %v288, %v320
    %v353 = vmul.u32 %v321, 2146121005
    %v354 = vmul.u32 %v322, 2146121005
    %v355 = vmul.u32 %v323, 2146121005
    %v356 = vmul.u32 %v324, 2146121005
    %v357 = vmul.u32 %v325, 2146121005
    %v358 = vmul.u32 %v326, 2146121005
    %v359 = vmul.u32 %v327, 2146121005
    %v360 = vmul.u32 %v328, 2146121005
    %v361 = vmul.u32 %v329, 2146121005
    %v362 = vmul.u32 %v330, 2146121005
    %v363 = vmul.u32 %v331, 2146121005
    %v364 = vmul.u32 %v332, 2146121005
    %v365 = vmul.u32 %v333, 2146121005
    %v366 = vmul.u32 %v334, 2146121005
    %v367 = vmul.u32 %v335, 2146121005
    %v368 = vmul.u32 %v336, 2146121005
    %v369 = vmul.u32 %v337, 2146121005
    %v370 = vmul.u32 %v338, 2146121005
    %v371 = vmul.u32 %v339, 2146121005
    %v372 = vmul.u32 %v340, 2146121005
    %v373 = vmul.u32 %v341, 2146121005
    %v374 = vmul.u32 %v342, 2146121005
    %v375 = vmul.u32 %v343, 2146121005
    %v376 = vmul.u32 %v344, 2146121005
    %v377 = vmul.u32 %v345, 2146121005
    %v378 = vmul.u32 %v346, 2146121005
    %v379 = vmul.u32 %v347, 2146121005
    %v380 = vmul.u32 %v348, 2146121005
    %v381 = vmul.u32 %v349, 2146121005
    %v382 = vmul.u32 %v350, 2146121005
    %v383 = vmul.u32 %v351, 2146121005
    %v384 = vmul.u32 %v352, 2146121005
    %v385 = vshrl.u32 %v353, 15
    %v386 = vshrl.u32 %v354, 15
    %v387 = vshrl.u32 %v355, 15
    %v388 = vshrl.u32 %v356, 15
    %v389 = vshrl.u32 %v357, 15
    %v390 = vshrl.u32 %v358, 15
    %v391 = vshrl.u32 %v359, 15
    %v392 = vshrl.u32 %v360, 15
    %v393 = vshrl.u32 %v361, 15
    %v394 = vshrl.u32 %v362, 15
    %v395 = vshrl.u32 %v363, 15
    %v396 = vshrl.u32 %v364, 15
    %v397 = vshrl.u32 %v365, 15
    %v398 = vshrl.u32 %v366, 15
    %v399 = vshrl.u32 %v367, 15
    %v400 = vshrl.u32 %v368, 15
    %v401 = vshrl.u32 %v369, 15
    %v402 = vshrl.u32 %v370, 15
    %v403 = vshrl.u32 %v371, 15
    %v404 = vshrl.u32 %v372, 15
    %v405 = vshrl.u32 %v373, 15
    %v406 = vshrl.u32 %v374, 15
    %v407 = vshrl.u32 %v375, 15
    %v408 = vshrl.u32 %v376, 15
    %v409 = vshrl.u32 %v377, 15
    %v410 = vshrl.u32 %v378, 15
    %v411 = vshrl.u32 %v379, 15
    %v412 = vshrl.u32 %v380, 15
    %v413 = vshrl.u32 %v381, 15
    %v414 = vshrl.u32 %v382, 15
    %v415 = vshrl.u32 %v383, 15
    %v416 = vshrl.u32 %v384, 15
    %v417 = vxor.u32 %v353, %v385
    %v418 = vxor.u32 %v354, %v386
    %v419 = vxor.u32 %v355, %v387
    %v420 = vxor.u32 %v356, %v388
    %v421 = vxor.u32 %v357, %v389
    %v422 = vxor.u32 %v358, %v390
    %v423 = vxor.u32 %v359, %v391
    %v424 = vxor.u32 %v360, %v392
    %v425 = vxor.u32 %v361, %v393
    %v426 = vxor.u32 %v362, %v394
    %v427 = vxor.u32 %v363, %v395
    %v428 = vxor.u32 %v364, %v396
    %v429 = vxor.u32 %v365, %v397
    %v430 = vxor.u32 %v366, %v398
    %v431 = vxor.u32 %v367, %v399
    %v432 = vxor.u32 %v368, %v400
    %v433 = vxor.u32 %v369, %v401
    %v434 = vxor.u32 %v370, %v402
    %v435 = vxor.u32 %v371, %v403
    %v436 = vxor.u32 %v372, %v404
    %v437 = vxor.u32 %v373, %v405
    %v438 = vxor.u32 %v374, %v406
    %v439 = vxor.u32 %v375, %v407
    %v440 = vxor.u32 %v376, %v408
    %v441 = vxor.u32 %v377, %v409
    %v442 = vxor.u32 %v378, %v410
    %v443 = vxor.u32 %v379, %v411
    %v444 = vxor.u32 %v380, %v412
    %v445 = vxor.u32 %v381, %v413
    %v446 = vxor.u32 %v382, %v414
    %v447 = vxor.u32 %v383, %v415
    %v448 = vxor.u32 %v384, %v416
    %v449 = vmul.u32 %v417, 2221713035
    %v450 = vmul.u32 %v418, 2221713035
    %v451 = vmul.u32 %v419, 2221713035
    %v452 = vmul.u32 %v420, 2221713035
    %v453 = vmul.u32 %v421, 2221713035
    %v454 = vmul.u32 %v422, 2221713035
    %v455 = vmul.u32 %v423, 2221713035
    %v456 = vmul.u32 %v424, 2221713035
    %v457 = vmul.u32 %v425, 2221713035
    %v458 = vmul.u32 %v426, 2221713035
    %v459 = vmul.u32 %v427, 2221713035
    %v460 = vmul.u32 %v428, 2221713035
    %v461 = vmul.u32 %v429, 2221713035
    %v462 = vmul.u32 %v430, 2221713035
    %v463 = vmul.u32 %v431, 2221713035
    %v464 = vmul.u32 %v432, 2221713035
    %v465 = vmul.u32 %v433, 2221713035
    %v466 = vmul.u32 %v434, 2221713035
    %v467 = vmul.u32 %v435, 2221713035
    %v468 = vmul.u32 %v436, 2221713035
    %v469 = vmul.u32 %v437, 2221713035
    %v470 = vmul.u32 %v438, 2221713035
    %v471 = vmul.u32 %v439, 2221713035
    %v472 = vmul.u32 %v440, 2221713035
    %v473 = vmul.u32 %v441, 2221713035
    %v474 = vmul.u32 %v442, 2221713035
    %v475 = vmul.u32 %v443, 2221713035
    %v476 = vmul.u32 %v444, 2221713035
    %v477 = vmul.u32 %v445, 2221713035
    %v478 = vmul.u32 %v446, 2221713035
    %v479 = vmul.u32 %v447, 2221713035
    %v480 = vmul.u32 %v448, 2221713035
    %v481 = vshrl.u32 %v449, 16
    %v482 = vshrl.u32 %v450, 16
    %v483 = vshrl.u32 %v451, 16
    %v484 = vshrl.u32 %v452, 16
    %v485 = vshrl.u32 %v453, 16
    %v486 = vshrl.u32 %v454, 16
    %v487 = vshrl.u32 %v455, 16
    %v488 = vshrl.u32 %v456, 16
    %v489 = vshrl.u32 %v457, 16
    %v490 = vshrl.u32 %v458, 16
    %v491 = vshrl.u32 %v459, 16
    %v492 = vshrl.u32 %v460, 16
    %v493 = vshrl.u32 %v461, 16
    %v494 = vshrl.u32 %v462, 16
    %v495 = vshrl.u32 %v463, 16
    %v496 = vshrl.u32 %v464, 16
    %v497 = vshrl.u32 %v465, 16
    %v498 = vshrl.u32 %v466, 16
    %v499 = vshrl.u32 %v467, 16
    %v500 = vshrl.u32 %v468, 16
    %v501 = vshrl.u32 %v469, 16
    %v502 = vshrl.u32 %v470, 16
    %v503 = vshrl.u32 %v471, 16
    %v504 = vshrl.u32 %v472, 16
    %v505 = vshrl.u32 %v473, 16
    %v506 = vshrl.u32 %v474, 16
    %v507 = vshrl.u32 %v475, 16
    %v508 = vshrl.u32 %v476, 16
    %v509 = vshrl.u32 %v477, 16
    %v510 = vshrl.u32 %v478, 16
    %v511 = vshrl.u32 %v479, 16
    %v512 = vshrl.u32 %v480, 16
    %v513 = vxor.u32 %v449, %v481
    %v514 = vxor.u32 %v450, %v482
    %v515 = vxor.u32 %v451, %v483
    %v516 = vxor.u32 %v452, %v484
    %v517 = vxor.u32 %v453, %v485
    %v518 = vxor.u32 %v454, %v486
    %v519 = vxor.u32 %v455, %v487
    %v520 = vxor.u32 %v456, %v488
    %v521 = vxor.u32 %v457, %v489
    %v522 = vxor.u32 %v458, %v490
    %v523 = vxor.u32 %v459, %v491
    %v524 = vxor.u32 %v460, %v492
    %v525 = vxor.u32 %v461, %v493
    %v526 = vxor.u32 %v462, %v494
    %v527 = vxor.u32 %v463, %v495
    %v528 = vxor.u32 %v464, %v496
    %v529 = vxor.u32 %v465, %v497
    %v530 = vxor.u32 %v466, %v498
    %v531 = vxor.u32 %v467, %v499
    %v532 = vxor.u32 %v468, %v500
    %v533 = vxor.u32 %v469, %v501
    %v534 = vxor.u32 %v470, %v502
    %v535 = vxor.u32 %v471, %v503
    %v536 = vxor.u32 %v472, %v504
    %v537 = vxor.u32 %v473, %v505
    %v538 = vxor.u32 %v474, %v506
    %v539 = vxor.u32 %v475, %v507
    %v540 = vxor.u32 %v476, %v508
    %v541 = vxor.u32 %v477, %v509
    %v542 = vxor.u32 %v478, %v510
    %v543 = vxor.u32 %v479, %v511
    %v544 = vxor.u32 %v480, %v512
    %v545 = vxor.u32 %v513, 3266489917
    %v546 = vxor.u32 %v514, 3266489917
    %v547 = vxor.u32 %v515, 3266489917
    %v548 = vxor.u32 %v516, 3266489917
    %v549 = vxor.u32 %v517, 3266489917
    %v550 = vxor.u32 %v518, 3266489917
    %v551 = vxor.u32 %v519, 3266489917
    %v552 = vxor.u32 %v520, 3266489917
    %v553 = vxor.u32 %v521, 3266489917
    %v554 = vxor.u32 %v522, 3266489917
    %v555 = vxor.u32 %v523, 3266489917
    %v556 = vxor.u32 %v524, 3266489917
    %v557 = vxor.u32 %v525, 3266489917
    %v558 = vxor.u32 %v526, 3266489917
    %v559 = vxor.u32 %v527, 3266489917
    %v560 = vxor.u32 %v528, 3266489917
    %v561 = vxor.u32 %v529, 3266489917
    %v562 = vxor.u32 %v530, 3266489917
    %v563 = vxor.u32 %v531, 3266489917
    %v564 = vxor.u32 %v532, 3266489917
    %v565 = vxor.u32 %v533, 3266489917
    %v566 = vxor.u32 %v534, 3266489917
    %v567 = vxor.u32 %v535, 3266489917
    %v568 = vxor.u32 %v536, 3266489917
    %v569 = vxor.u32 %v537, 3266489917
    %v570 = vxor.u32 %v538, 3266489917
    %v571 = vxor.u32 %v539, 3266489917
    %v572 = vxor.u32 %v540, 3266489917
    %v573 = vxor.u32 %v541, 3266489917
    %v574 = vxor.u32 %v542, 3266489917
    %v575 = vxor.u32 %v543, 3266489917
    %v576 = vxor.u32 %v544, 3266489917
    %v577 = vshrl.u32 %v545, 16
    %v578 = vshrl.u32 %v546, 16
    %v579 = vshrl.u32 %v547, 16
    %v580 = vshrl.u32 %v548, 16
    %v581 = vshrl.u32 %v549, 16
    %v582 = vshrl.u32 %v550, 16
    %v583 = vshrl.u32 %v551, 16
    %v584 = vshrl.u32 %v552, 16
    %v585 = vshrl.u32 %v553, 16
    %v586 = vshrl.u32 %v554, 16
    %v587 = vshrl.u32 %v555, 16
    %v588 = vshrl.u32 %v556, 16
    %v589 = vshrl.u32 %v557, 16
    %v590 = vshrl.u32 %v558, 16
    %v591 = vshrl.u32 %v559, 16
    %v592 = vshrl.u32 %v560, 16
    %v593 = vshrl.u32 %v561, 16
    %v594 = vshrl.u32 %v562, 16
    %v595 = vshrl.u32 %v563, 16
    %v596 = vshrl.u32 %v564, 16
    %v597 = vshrl.u32 %v565, 16
    %v598 = vshrl.u32 %v566, 16
    %v599 = vshrl.u32 %v567, 16
    %v600 = vshrl.u32 %v568, 16
    %v601 = vshrl.u32 %v569, 16
    %v602 = vshrl.u32 %v570, 16
    %v603 = vshrl.u32 %v571, 16
    %v604 = vshrl.u32 %v572, 16
    %v605 = vshrl.u32 %v573, 16
    %v606 = vshrl.u32 %v574, 16
    %v607 = vshrl.u32 %v575, 16
    %v608 = vshrl.u32 %v576, 16
    %v609 = vxor.u32 %v545, %v577
    %v610 = vxor.u32 %v546, %v578
    %v611 = vxor.u32 %v547, %v579
    %v612 = vxor.u32 %v548, %v580
    %v613 = vxor.u32 %v549, %v581
    %v614 = vxor.u32 %v550, %v582
    %v615 = vxor.u32 %v551, %v583
    %v616 = vxor.u32 %v552, %v584
    %v617 = vxor.u32 %v553, %v585
    %v618 = vxor.u32 %v554, %v586
    %v619 = vxor.u32 %v555, %v587
    %v620 = vxor.u32 %v556, %v588
    %v621 = vxor.u32 %v557, %v589
    %v622 = vxor.u32 %v558, %v590
    %v623 = vxor.u32 %v559, %v591
    %v624 = vxor.u32 %v560, %v592
    %v625 = vxor.u32 %v561, %v593
    %v626 = vxor.u32 %v562, %v594
    %v627 = vxor.u32 %v563, %v595
    %v628 = vxor.u32 %v564, %v596
    %v629 = vxor.u32 %v565, %v597
    %v630 = vxor.u32 %v566, %v598
    %v631 = vxor.u32 %v567, %v599
    %v632 = vxor.u32 %v568, %v600
    %v633 = vxor.u32 %v569, %v601
    %v634 = vxor.u32 %v570, %v602
    %v635 = vxor.u32 %v571, %v603
    %v636 = vxor.u32 %v572, %v604
    %v637 = vxor.u32 %v573, %v605
    %v638 = vxor.u32 %v574, %v606
    %v639 = vxor.u32 %v575, %v607
    %v640 = vxor.u32 %v576, %v608
    %v641 = vmul.u32 %v609, 2146121005
    %v642 = vmul.u32 %v610, 2146121005
    %v643 = vmul.u32 %v611, 2146121005
    %v644 = vmul.u32 %v612, 2146121005
    %v645 = vmul.u32 %v613, 2146121005
    %v646 = vmul.u32 %v614, 2146121005
    %v647 = vmul.u32 %v615, 2146121005
    %v648 = vmul.u32 %v616, 2146121005
    %v649 = vmul.u32 %v617, 2146121005
    %v650 = vmul.u32 %v618, 2146121005
    %v651 = vmul.u32 %v619, 2146121005
    %v652 = vmul.u32 %v620, 2146121005
    %v653 = vmul.u32 %v621, 2146121005
    %v654 = vmul.u32 %v622, 2146121005
    %v655 = vmul.u32 %v623, 2146121005
    %v656 = vmul.u32 %v624, 2146121005
    %v657 = vmul.u32 %v625, 2146121005
    %v658 = vmul.u32 %v626, 2146121005
    %v659 = vmul.u32 %v627, 2146121005
    %v660 = vmul.u32 %v628, 2146121005
    %v661 = vmul.u32 %v629, 2146121005
    %v662 = vmul.u32 %v630, 2146121005
    %v663 = vmul.u32 %v631, 2146121005
    %v664 = vmul.u32 %v632, 2146121005
    %v665 = vmul.u32 %v633, 2146121005
    %v666 = vmul.u32 %v634, 2146121005
    %v667 = vmul.u32 %v635, 2146121005
    %v668 = vmul.u32 %v636, 2146121005
    %v669 = vmul.u32 %v637, 2146121005
    %v670 = vmul.u32 %v638, 2146121005
    %v671 = vmul.u32 %v639, 2146121005
    %v672 = vmul.u32 %v640, 2146121005
    %v673 = vshrl.u32 %v641, 15
    %v674 = vshrl.u32 %v642, 15
    %v675 = vshrl.u32 %v643, 15
    %v676 = vshrl.u32 %v644, 15
    %v677 = vshrl.u32 %v645, 15
    %v678 = vshrl.u32 %v646, 15
    %v679 = vshrl.u32 %v647, 15
    %v680 = vshrl.u32 %v648, 15
    %v681 = vshrl.u32 %v649, 15
    %v682 = vshrl.u32 %v650, 15
    %v683 = vshrl.u32 %v651, 15
    %v684 = vshrl.u32 %v652, 15
    %v685 = vshrl.u32 %v653, 15
    %v686 = vshrl.u32 %v654, 15
    %v687 = vshrl.u32 %v655, 15
    %v688 = vshrl.u32 %v656, 15
    %v689 = vshrl.u32 %v657, 15
    %v690 = vshrl.u32 %v658, 15
    %v691 = vshrl.u32 %v659, 15
    %v692 = vshrl.u32 %v660, 15
    %v693 = vshrl.u32 %v661, 15
    %v694 = vshrl.u32 %v662, 15
    %v695 = vshrl.u32 %v663, 15
    %v696 = vshrl.u32 %v664, 15
    %v697 = vshrl.u32 %v665, 15
    %v698 = vshrl.u32 %v666, 15
    %v699 = vshrl.u32 %v667, 15
    %v700 = vshrl.u32 %v668, 15
    %v701 = vshrl.u32 %v669, 15
    %v702 = vshrl.u32 %v670, 15
    %v703 = vshrl.u32 %v671, 15
    %v704 = vshrl.u32 %v672, 15
    %v705 = vxor.u32 %v641, %v673
    %v706 = vxor.u32 %v642, %v674
    %v707 = vxor.u32 %v643, %v675
    %v708 = vxor.u32 %v644, %v676
    %v709 = vxor.u32 %v645, %v677
    %v710 = vxor.u32 %v646, %v678
    %v711 = vxor.u32 %v647, %v679
    %v712 = vxor.u32 %v648, %v680
    %v713 = vxor.u32 %v649, %v681
    %v714 = vxor.u32 %v650, %v682
    %v715 = vxor.u32 %v651, %v683
    %v716 = vxor.u32 %v652, %v684
    %v717 = vxor.u32 %v653, %v685
    %v718 = vxor.u32 %v654, %v686
    %v719 = vxor.u32 %v655, %v687
    %v720 = vxor.u32 %v656, %v688
    %v721 = vxor.u32 %v657, %v689
    %v722 = vxor.u32 %v658, %v690
    %v723 = vxor.u32 %v659, %v691
    %v724 = vxor.u32 %v660, %v692
    %v725 = vxor.u32 %v661, %v693
    %v726 = vxor.u32 %v662, %v694
    %v727 = vxor.u32 %v663, %v695
    %v728 = vxor.u32 %v664, %v696
    %v729 = vxor.u32 %v665, %v697
    %v730 = vxor.u32 %v666, %v698
    %v731 = vxor.u32 %v667, %v699
    %v732 = vxor.u32 %v668, %v700
    %v733 = vxor.u32 %v669, %v701
    %v734 = vxor.u32 %v670, %v702
    %v735 = vxor.u32 %v671, %v703
    %v736 = vxor.u32 %v672, %v704
    %v737 = vmul.u32 %v705, 2221713035
    %v738 = vmul.u32 %v706, 2221713035
    %v739 = vmul.u32 %v707, 2221713035
    %v740 = vmul.u32 %v708, 2221713035
    %v741 = vmul.u32 %v709, 2221713035
    %v742 = vmul.u32 %v710, 2221713035
    %v743 = vmul.u32 %v711, 2221713035
    %v744 = vmul.u32 %v712, 2221713035
    %v745 = vmul.u32 %v713, 2221713035
    %v746 = vmul.u32 %v714, 2221713035
    %v747 = vmul.u32 %v715, 2221713035
    %v748 = vmul.u32 %v716, 2221713035
    %v749 = vmul.u32 %v717, 2221713035
    %v750 = vmul.u32 %v718, 2221713035
    %v751 = vmul.u32 %v719, 2221713035
    %v752 = vmul.u32 %v720, 2221713035
    %v753 = vmul.u32 %v721, 2221713035
    %v754 = vmul.u32 %v722, 2221713035
    %v755 = vmul.u32 %v723, 2221713035
    %v756 = vmul.u32 %v724, 2221713035
    %v757 = vmul.u32 %v725, 2221713035
    %v758 = vmul.u32 %v726, 2221713035
    %v759 = vmul.u32 %v727, 2221713035
    %v760 = vmul.u32 %v728, 2221713035
    %v761 = vmul.u32 %v729, 2221713035
    %v762 = vmul.u32 %v730, 2221713035
    %v763 = vmul.u32 %v731, 2221713035
    %v764 = vmul.u32 %v732, 2221713035
    %v765 = vmul.u32 %v733, 2221713035
    %v766 = vmul.u32 %v734, 2221713035
    %v767 = vmul.u32 %v735, 2221713035
    %v768 = vmul.u32 %v736, 2221713035
    %v769 = vshrl.u32 %v737, 16
    %v770 = vshrl.u32 %v738, 16
    %v771 = vshrl.u32 %v739, 16
    %v772 = vshrl.u32 %v740, 16
    %v773 = vshrl.u32 %v741, 16
    %v774 = vshrl.u32 %v742, 16
    %v775 = vshrl.u32 %v743, 16
    %v776 = vshrl.u32 %v744, 16
    %v777 = vshrl.u32 %v745, 16
    %v778 = vshrl.u32 %v746, 16
    %v779 = vshrl.u32 %v747, 16
    %v780 = vshrl.u32 %v748, 16
    %v781 = vshrl.u32 %v749, 16
    %v782 = vshrl.u32 %v750, 16
    %v783 = vshrl.u32 %v751, 16
    %v784 = vshrl.u32 %v752, 16
    %v785 = vshrl.u32 %v753, 16
    %v786 = vshrl.u32 %v754, 16
    %v787 = vshrl.u32 %v755, 16
    %v788 = vshrl.u32 %v756, 16
    %v789 = vshrl.u32 %v757, 16
    %v790 = vshrl.u32 %v758, 16
    %v791 = vshrl.u32 %v759, 16
    %v792 = vshrl.u32 %v760, 16
    %v793 = vshrl.u32 %v761, 16
    %v794 = vshrl.u32 %v762, 16
    %v795 = vshrl.u32 %v763, 16
    %v796 = vshrl.u32 %v764, 16
    %v797 = vshrl.u32 %v765, 16
    %v798 = vshrl.u32 %v766, 16
    %v799 = vshrl.u32 %v767, 16
    %v800 = vshrl.u32 %v768, 16
    %v801 = vxor.u32 %v737, %v769
    %v802 = vxor.u32 %v738, %v770
    %v803 = vxor.u32 %v739, %v771
    %v804 = vxor.u32 %v740, %v772
    %v805 = vxor.u32 %v741, %v773
    %v806 = vxor.u32 %v742, %v774
    %v807 = vxor.u32 %v743, %v775
    %v808 = vxor.u32 %v744, %v776
    %v809 = vxor.u32 %v745, %v777
    %v810 = vxor.u32 %v746, %v778
    %v811 = vxor.u32 %v747, %v779
    %v812 = vxor.u32 %v748, %v780
    %v813 = vxor.u32 %v749, %v781
    %v814 = vxor.u32 %v750, %v782
    %v815 = vxor.u32 %v751, %v783
    %v816 = vxor.u32 %v752, %v784
    %v817 = vxor.u32 %v753, %v785
    %v818 = vxor.u32 %v754, %v786
    %v819 = vxor.u32 %v755, %v787
    %v820 = vxor.u32 %v756, %v788
    %v821 = vxor.u32 %v757, %v789
    %v822 = vxor.u32 %v758, %v790
    %v823 = vxor.u32 %v759, %v791
    %v824 = vxor.u32 %v760, %v792
    %v825 = vxor.u32 %v761, %v793
    %v826 = vxor.u32 %v762, %v794
    %v827 = vxor.u32 %v763, %v795
    %v828 = vxor.u32 %v764, %v796
    %v829 = vxor.u32 %v765, %v797
    %v830 = vxor.u32 %v766, %v798
    %v831 = vxor.u32 %v767, %v799
    %v832 = vxor.u32 %v768, %v800
    %vm833 = vcmp.ge.u32.totalorder %v801, 2147483648
    %vm834 = vcmp.ge.u32.totalorder %v802, 2147483648
    %vm835 = vcmp.ge.u32.totalorder %v803, 2147483648
    %vm836 = vcmp.ge.u32.totalorder %v804, 2147483648
    %vm837 = vcmp.ge.u32.totalorder %v805, 2147483648
    %vm838 = vcmp.ge.u32.totalorder %v806, 2147483648
    %vm839 = vcmp.ge.u32.totalorder %v807, 2147483648
    %vm840 = vcmp.ge.u32.totalorder %v808, 2147483648
    %vm841 = vcmp.ge.u32.totalorder %v809, 2147483648
    %vm842 = vcmp.ge.u32.totalorder %v810, 2147483648
    %vm843 = vcmp.ge.u32.totalorder %v811, 2147483648
    %vm844 = vcmp.ge.u32.totalorder %v812, 2147483648
    %vm845 = vcmp.ge.u32.totalorder %v813, 2147483648
    %vm846 = vcmp.ge.u32.totalorder %v814, 2147483648
    %vm847 = vcmp.ge.u32.totalorder %v815, 2147483648
    %vm848 = vcmp.ge.u32.totalorder %v816, 2147483648
    %vm849 = vcmp.ge.u32.totalorder %v817, 2147483648
    %vm850 = vcmp.ge.u32.totalorder %v818, 2147483648
    %vm851 = vcmp.ge.u32.totalorder %v819, 2147483648
    %vm852 = vcmp.ge.u32.totalorder %v820, 2147483648
    %vm853 = vcmp.ge.u32.totalorder %v821, 2147483648
    %vm854 = vcmp.ge.u32.totalorder %v822, 2147483648
    %vm855 = vcmp.ge.u32.totalorder %v823, 2147483648
    %vm856 = vcmp.ge.u32.totalorder %v824, 2147483648
    %vm857 = vcmp.ge.u32.totalorder %v825, 2147483648
    %vm858 = vcmp.ge.u32.totalorder %v826, 2147483648
    %vm859 = vcmp.ge.u32.totalorder %v827, 2147483648
    %vm860 = vcmp.ge.u32.totalorder %v828, 2147483648
    %vm861 = vcmp.ge.u32.totalorder %v829, 2147483648
    %vm862 = vcmp.ge.u32.totalorder %v830, 2147483648
    %vm863 = vcmp.ge.u32.totalorder %v831, 2147483648
    %vm864 = vcmp.ge.u32.totalorder %v832, 2147483648
    %v865 = vmul.f32 %v57, 2.0
    %v866 = vmul.f32 %v58, 2.0
    %v867 = vmul.f32 %v59, 2.0
    %v868 = vmul.f32 %v60, 2.0
    %v869 = vmul.f32 %v61, 2.0
    %v870 = vmul.f32 %v62, 2.0
    %v871 = vmul.f32 %v63, 2.0
    %v872 = vmul.f32 %v64, 2.0
    %v873 = vmul.f32 %v65, 2.0
    %v874 = vmul.f32 %v66, 2.0
    %v875 = vmul.f32 %v67, 2.0
    %v876 = vmul.f32 %v68, 2.0
    %v877 = vmul.f32 %v69, 2.0
    %v878 = vmul.f32 %v70, 2.0
    %v879 = vmul.f32 %v71, 2.0
    %v880 = vmul.f32 %v72, 2.0
    %v881 = vmul.f32 %v73, 2.0
    %v882 = vmul.f32 %v74, 2.0
    %v883 = vmul.f32 %v75, 2.0
    %v884 = vmul.f32 %v76, 2.0
    %v885 = vmul.f32 %v77, 2.0
    %v886 = vmul.f32 %v78, 2.0
    %v887 = vmul.f32 %v79, 2.0
    %v888 = vmul.f32 %v80, 2.0
    %v889 = vmul.f32 %v81, 2.0
    %v890 = vmul.f32 %v82, 2.0
    %v891 = vmul.f32 %v83, 2.0
    %v892 = vmul.f32 %v84, 2.0
    %v893 = vmul.f32 %v85, 2.0
    %v894 = vmul.f32 %v86, 2.0
    %v895 = vmul.f32 %v87, 2.0
    %v896 = vmul.f32 %v88, 2.0
    %v897 = vsel %vm833, %v865, 0.0
    %v898 = vsel %vm834, %v866, 0.0
    %v899 = vsel %vm835, %v867, 0.0
    %v900 = vsel %vm836, %v868, 0.0
    %v901 = vsel %vm837, %v869, 0.0
    %v902 = vsel %vm838, %v870, 0.0
    %v903 = vsel %vm839, %v871, 0.0
    %v904 = vsel %vm840, %v872, 0.0
    %v905 = vsel %vm841, %v873, 0.0
    %v906 = vsel %vm842, %v874, 0.0
    %v907 = vsel %vm843, %v875, 0.0
    %v908 = vsel %vm844, %v876, 0.0
    %v909 = vsel %vm845, %v877, 0.0
    %v910 = vsel %vm846, %v878, 0.0
    %v911 = vsel %vm847, %v879, 0.0
    %v912 = vsel %vm848, %v880, 0.0
    %v913 = vsel %vm849, %v881, 0.0
    %v914 = vsel %vm850, %v882, 0.0
    %v915 = vsel %vm851, %v883, 0.0
    %v916 = vsel %vm852, %v884, 0.0
    %v917 = vsel %vm853, %v885, 0.0
    %v918 = vsel %vm854, %v886, 0.0
    %v919 = vsel %vm855, %v887, 0.0
    %v920 = vsel %vm856, %v888, 0.0
    %v921 = vsel %vm857, %v889, 0.0
    %v922 = vsel %vm858, %v890, 0.0
    %v923 = vsel %vm859, %v891, 0.0
    %v924 = vsel %vm860, %v892, 0.0
    %v925 = vsel %vm861, %v893, 0.0
    %v926 = vsel %vm862, %v894, 0.0
    %v927 = vsel %vm863, %v895, 0.0
    %v928 = vsel %vm864, %v896, 0.0
    %929 = vst [vmem:[#allocation7] sm:$0xff] %v897
    %930 = vst [vmem:[#allocation7 + $0x8] sm:$0xff] %v898
    %931 = vst [vmem:[#allocation7 + $0x10] sm:$0xff] %v899
    %932 = vst [vmem:[#allocation7 + $0x18] sm:$0xff] %v900
    %933 = vst [vmem:[#allocation7 + $0x20] sm:$0xff] %v901
    %934 = vst [vmem:[#allocation7 + $0x28] sm:$0xff] %v902
    %935 = vst [vmem:[#allocation7 + $0x30] sm:$0xff] %v903
    %936 = vst [vmem:[#allocation7 + $0x38] sm:$0xff] %v904
    %937 = vst [vmem:[#allocation7 + $0x40] sm:$0xff] %v905
    %938 = vst [vmem:[#allocation7 + $0x48] sm:$0xff] %v906
    %939 = vst [vmem:[#allocation7 + $0x50] sm:$0xff] %v907
    %940 = vst [vmem:[#allocation7 + $0x58] sm:$0xff] %v908
    %941 = vst [vmem:[#allocation7 + $0x60] sm:$0xff] %v909
    %942 = vst [vmem:[#allocation7 + $0x68] sm:$0xff] %v910
    %943 = vst [vmem:[#allocation7 + $0x70] sm:$0xff] %v911
    %944 = vst [vmem:[#allocation7 + $0x78] sm:$0xff] %v912
    %945 = vst [vmem:[#allocation7 + $0x80] sm:$0xff] %v913
    %946 = vst [vmem:[#allocation7 + $0x88] sm:$0xff] %v914
    %947 = vst [vmem:[#allocation7 + $0x90] sm:$0xff] %v915
    %948 = vst [vmem:[#allocation7 + $0x98] sm:$0xff] %v916
    %949 = vst [vmem:[#allocation7 + $0xa0] sm:$0xff] %v917
    %950 = vst [vmem:[#allocation7 + $0xa8] sm:$0xff] %v918
    %951 = vst [vmem:[#allocation7 + $0xb0] sm:$0xff] %v919
    %952 = vst [vmem:[#allocation7 + $0xb8] sm:$0xff] %v920
    %953 = vst [vmem:[#allocation7 + $0xc0] sm:$0xff] %v921
    %954 = vst [vmem:[#allocation7 + $0xc8] sm:$0xff] %v922
    %955 = vst [vmem:[#allocation7 + $0xd0] sm:$0xff] %v923
    %956 = vst [vmem:[#allocation7 + $0xd8] sm:$0xff] %v924
    %957 = vst [vmem:[#allocation7 + $0xe0] sm:$0xff] %v925
    %958 = vst [vmem:[#allocation7 + $0xe8] sm:$0xff] %v926
    %959 = vst [vmem:[#allocation7 + $0xf0] sm:$0xff] %v927
    %960 = vst [vmem:[#allocation7 + $0xf8] sm:$0xff] %v928
    // Predicated region
    $region10: #{tpu_custom_call.1} parent=1 // pred_check
      _
    $region11: #{tpu_custom_call.1} parent=1 // pred_check_branch
      %962 = sbr.rel (0) target = $region13
    $region12: #{tpu_custom_call.1} parent=1 // pred_region
      %s964 = ssub.s32 4096, 4096
      %965 = vsyncadd [#allocation6], %s964
      %s966 = sshll.u32 [#allocation7], 4
      %s967 = int_to_ptr.vmem [resolvable:$true] %s966
      %972 = dma.vmem_to_hbm [thread:$0]  %s967, 4096, %s2, [#allocation6], 128, 128, 8
    $region13: #{tpu_custom_call.1} parent=1 // pred_fallthru
      _
    // Predicated region
    $region14: #{tpu_custom_call.1} parent=1 // pred_check
      _
    $region15: #{tpu_custom_call.1} parent=1 // pred_check_branch
      %974 = sbr.rel (0) target = $region17
    $region16: #{tpu_custom_call.1} parent=1 // pred_region
      %975 = dma.done [#allocation6], 4096
    $region17: #{tpu_custom_call.1} parent=1 // pred_fallthru
      _
    %976 = vsyncpa [#allocation5], 1
    %977 = vsyncpa [#allocation6], 1

</llo_original>
